<compile_context>
chip_gen: v7x
topology: tpu7x:2x2x1
jax: 0.10.0
libtpu: 0.0.40
codegen_flags: <defaults>
</compile_context>

<pallas_src>
import functools

import jax
import jax.numpy as jnp
from jax.experimental import pallas as pl
from jax.experimental.pallas import tpu as pltpu

NEG_SLOPE = 0.01          # torch.nn.LeakyReLU default
MASK_FILL = -1.0e8        # value used by the reference module
A_PAD = 128               # action axis padded to a full 128-lane vreg
_MAX_TB = 512             # batch tile (multiple of 128 so outputs stay lane-dense)


def _round_up(x, m):
    return ((x + m - 1) // m) * m


def _leaky_relu(x):
    return jnp.where(x > 0, x, NEG_SLOPE * x)


def _tiling(B):
    b8 = _round_up(B, 8)
    tb = b8 if b8 <= _MAX_TB else _MAX_TB
    b_pad = _round_up(B, tb)
    return tb, b_pad, b_pad // tb


# ---------------------------------------------------------------------------
# Shared in-kernel body: MLP -> mask -> numerically stable log-softmax
# ---------------------------------------------------------------------------
def _masked_log_softmax(x_ref, mask_ref, w1_ref, b1_ref, w2_ref, b2_ref,
                        w3_ref, b3_ref, matmul_dtype):
    def dense(a, w_ref, b_ref):
        return jnp.dot(a.astype(matmul_dtype), w_ref[...].astype(matmul_dtype),
                       preferred_element_type=jnp.float32) + b_ref[...]

    h1 = _leaky_relu(dense(x_ref[...], w1_ref, b1_ref))          # [TB, 128]
    h2 = _leaky_relu(dense(h1, w2_ref, b2_ref))                  # [TB, 128]
    logits = dense(h2, w3_ref, b3_ref)                           # [TB, A_PAD]

    # torch.where(masks, output, -1e8); padded action lanes always have mask=0
    logits = jnp.where(mask_ref[...] != 0, logits, MASK_FILL)

    m = jnp.max(logits, axis=-1, keepdims=True)
    z = logits - m
    lse = jnp.log(jnp.sum(jnp.exp(z), axis=-1, keepdims=True))
    return z - lse                                               # [TB, A_PAD]


# ---------------------------------------------------------------------------
# forward(): sample action (Gumbel-max) + its log-prob
# ---------------------------------------------------------------------------
def actor_kernel(x_ref, mask_ref, g_ref,
                 w1_ref, b1_ref, w2_ref, b2_ref, w3_ref, b3_ref,
                 action_ref, logprob_ref, *, matmul_dtype):
    logp = _masked_log_softmax(x_ref, mask_ref, w1_ref, b1_ref, w2_ref, b2_ref,
                               w3_ref, b3_ref, matmul_dtype)     # [TB, A_PAD]
    score = logp + g_ref[...]                                    # [TB, A_PAD]

    # Transpose so per-row results land on the 128-lane axis (lane-dense
    # (1, TB) output stores instead of masked (TB, 1) stores).
    scoreT = score.T                                             # [A_PAD, TB]
    logpT = logp.T                                               # [A_PAD, TB]
    a_pad = scoreT.shape[0]

    smaxT = jnp.max(scoreT, axis=0, keepdims=True)               # [1, TB]
    idxT = jax.lax.broadcasted_iota(jnp.int32, scoreT.shape, 0)  # [A_PAD, TB]
    actionT = jnp.min(jnp.where(scoreT == smaxT, idxT, a_pad),
                      axis=0, keepdims=True)                     # [1, TB]
    lpT = jnp.sum(jnp.where(idxT == actionT, logpT, 0.0),
                  axis=0, keepdims=True)                         # [1, TB]

    action_ref[...] = actionT.astype(jnp.int32)
    logprob_ref[...] = lpT.astype(jnp.float32)


# ---------------------------------------------------------------------------
# policy(): log-prob of given actions + distribution entropy
# ---------------------------------------------------------------------------
def policy_kernel(x_ref, mask_ref, act_ref,
                  w1_ref, b1_ref, w2_ref, b2_ref, w3_ref, b3_ref,
                  logprob_ref, entropy_ref, *, matmul_dtype):
    logp = _masked_log_softmax(x_ref, mask_ref, w1_ref, b1_ref, w2_ref, b2_ref,
                               w3_ref, b3_ref, matmul_dtype)     # [TB, A_PAD]
    logpT = logp.T                                               # [A_PAD, TB]
    idxT = jax.lax.broadcasted_iota(jnp.int32, logpT.shape, 0)   # [A_PAD, TB]
    actT = act_ref[...]                                          # [1, TB] int32

    lpT = jnp.sum(jnp.where(idxT == actT, logpT, 0.0),
                  axis=0, keepdims=True)                         # [1, TB]
    pT = jnp.exp(logpT)
    entT = -jnp.sum(pT * logpT, axis=0, keepdims=True)           # [1, TB]

    logprob_ref[...] = lpT.astype(jnp.float32)
    entropy_ref[...] = entT.astype(jnp.float32)


# ---------------------------------------------------------------------------
# Host-side wrappers
# ---------------------------------------------------------------------------
def _prepare(params, states, masks):
    B, din = states.shape
    hidden = params["w1"].shape[1]
    a_pad = params["w3"].shape[1]          # already padded to >= 128
    tb, b_pad, ntiles = _tiling(B)

    states_p = jnp.pad(states.astype(jnp.float32), ((0, b_pad - B), (0, 0)))
    if masks is None:
        masks_p = jnp.broadcast_to(params["valid"], (b_pad, a_pad))
    else:
        A = masks.shape[1]
        masks_p = jnp.pad(masks.astype(jnp.float32),
                          ((0, b_pad - B), (0, a_pad - A)))
    return states_p, masks_p, B, din, hidden, a_pad, tb, b_pad, ntiles


def _weight_specs(din, hidden, a_pad):
    rep = lambda i: (0, 0)                 # weights/biases stay VMEM-resident
    return [pl.BlockSpec((din, hidden), rep),      # w1
            pl.BlockSpec((1, hidden), rep),        # b1
            pl.BlockSpec((hidden, hidden), rep),   # w2
            pl.BlockSpec((1, hidden), rep),        # b2
            pl.BlockSpec((hidden, a_pad), rep),    # w3 (padded)
            pl.BlockSpec((1, a_pad), rep)]         # b3 (padded)


_COMPILER_PARAMS = pltpu.CompilerParams(
    dimension_semantics=("parallel",),
    vmem_limit_bytes=32 * 1024 * 1024)


@functools.partial(jax.jit, static_argnames=("use_bf16_matmul",))
def actor_forward(params, states, key, masks=None, use_bf16_matmul=False):
    """Returns (action [B] int32, log_prob [B] f32) like Actor.forward."""
    (states_p, masks_p, B, din, hidden, a_pad,
     tb, b_pad, ntiles) = _prepare(params, states, masks)

    # Gumbel noise generated outside the kernel (portable; unique per row).
    gumbel = jax.random.gumbel(key, (b_pad, a_pad), jnp.float32)

    row = lambda i: (i, 0)
    out_map = lambda i: (0, i)

    kernel = functools.partial(
        actor_kernel,
        matmul_dtype=jnp.bfloat16 if use_bf16_matmul else jnp.float32)

    action, logprob = pl.pallas_call(
        kernel,
        grid=(ntiles,),
        out_shape=(jax.ShapeDtypeStruct((1, b_pad), jnp.int32),
                   jax.ShapeDtypeStruct((1, b_pad), jnp.float32)),
        in_specs=[pl.BlockSpec((tb, din), row),      # states
                  pl.BlockSpec((tb, a_pad), row),    # masks (padded)
                  pl.BlockSpec((tb, a_pad), row),    # gumbel noise
                  *_weight_specs(din, hidden, a_pad)],
        out_specs=(pl.BlockSpec((1, tb), out_map),
                   pl.BlockSpec((1, tb), out_map)),
        compiler_params=_COMPILER_PARAMS,
    )(states_p, masks_p, gumbel,
      params["w1"], params["b1"], params["w2"], params["b2"],
      params["w3"], params["b3"])

    return action[0, :B], logprob[0, :B]


@functools.partial(jax.jit, static_argnames=("use_bf16_matmul",))
def actor_policy(params, states, actions, masks=None, use_bf16_matmul=False):
    """Returns (log_prob [B] f32, entropy [B] f32) like Actor.policy."""
    (states_p, masks_p, B, din, hidden, a_pad,
     tb, b_pad, ntiles) = _prepare(params, states, masks)

    actions_p = jnp.pad(actions.astype(jnp.int32),
                        (0, b_pad - B)).reshape(1, b_pad)

    row = lambda i: (i, 0)
    out_map = lambda i: (0, i)

    kernel = functools.partial(
        policy_kernel,
        matmul_dtype=jnp.bfloat16 if use_bf16_matmul else jnp.float32)

    logprob, entropy = pl.pallas_call(
        kernel,
        grid=(ntiles,),
        out_shape=(jax.ShapeDtypeStruct((1, b_pad), jnp.float32),
                   jax.ShapeDtypeStruct((1, b_pad), jnp.float32)),
        in_specs=[pl.BlockSpec((tb, din), row),      # states
                  pl.BlockSpec((tb, a_pad), row),    # masks (padded)
                  pl.BlockSpec((1, tb), out_map),    # actions (lane-dense row)
                  *_weight_specs(din, hidden, a_pad)],
        out_specs=(pl.BlockSpec((1, tb), out_map),
                   pl.BlockSpec((1, tb), out_map)),
        compiler_params=_COMPILER_PARAMS,
    )(states_p, masks_p, actions_p,
      params["w1"], params["b1"], params["w2"], params["b2"],
      params["w3"], params["b3"])

    return logprob[0, :B], entropy[0, :B]


def init_actor_params(key, input_dim, output_dim, hidden=128):
    """torch.nn.Linear-style init (uniform +-1/sqrt(fan_in)); weights stored
    as [in, out] so the kernel computes x @ W + b.  w3/b3 are zero-padded to
    128 action lanes (padded lanes are masked out at runtime)."""
    ks = jax.random.split(key, 6)

    def linear(kw, kb, fan_in, fan_out):
        bound = 1.0 / jnp.sqrt(fan_in)
        w = jax.random.uniform(kw, (fan_in, fan_out), jnp.float32, -bound, bound)
        b = jax.random.uniform(kb, (1, fan_out), jnp.float32, -bound, bound)
        return w, b

    w1, b1 = linear(ks[0], ks[1], input_dim, hidden)
    w2, b2 = linear(ks[2], ks[3], hidden, hidden)
    w3, b3 = linear(ks[4], ks[5], hidden, output_dim)

    a_pad = max(A_PAD, _round_up(output_dim, 128))
    w3 = jnp.pad(w3, ((0, 0), (0, a_pad - output_dim)))
    b3 = jnp.pad(b3, ((0, 0), (0, a_pad - output_dim)))
    valid = jnp.zeros((1, a_pad), jnp.float32).at[:, :output_dim].set(1.0)
    return {"w1": w1, "b1": b1, "w2": w2, "b2": b2, "w3": w3, "b3": b3,
            "valid": valid}


# ---------------------------------------------------------------------------
# Pure-JAX reference (for validation only)
# ---------------------------------------------------------------------------
def _ref_log_softmax(params, states, masks):
    x = states.astype(jnp.float32)
    h1 = _leaky_relu(x @ params["w1"] + params["b1"])
    h2 = _leaky_relu(h1 @ params["w2"] + params["b2"])
    logits = h2 @ params["w3"] + params["b3"]            # [B, a_pad]
    a_pad = logits.shape[1]
    A = masks.shape[1]
    masks_p = jnp.pad(masks.astype(jnp.float32), ((0, 0), (0, a_pad - A)))
    logits = jnp.where(masks_p != 0, logits, MASK_FILL)
    return jax.nn.log_softmax(logits, axis=-1)


if __name__ == "__main__":
    key = jax.random.PRNGKey(0)
    k_param, k_state, k_sample = jax.random.split(key, 3)

    B, INPUT_DIM, OUTPUT_DIM = 8, 32, 8

    params = init_actor_params(k_param, INPUT_DIM, OUTPUT_DIM)
    states = jax.random.normal(k_state, (B, INPUT_DIM), jnp.float32)
    # mask: 1.0 = allowed, 0.0 = disallowed (first action masked out everywhere)
    masks = jnp.ones((B, OUTPUT_DIM), jnp.float32).at[:, 0].set(0.0)

    # ---- forward (sampling) path ----
    action, log_prob = actor_forward(params, states, k_sample, masks)
    jax.block_until_ready((action, log_prob))
    assert action.shape == (B,) and log_prob.shape == (B,)
    assert bool(jnp.all((action >= 0) & (action < OUTPUT_DIM)))
    assert bool(jnp.all(action != 0))          # masked action never sampled
    assert bool(jnp.all(log_prob <= 0.0))      # valid log-probabilities

    ref_logp = _ref_log_softmax(params, states, masks)
    ref_at_action = ref_logp[jnp.arange(B), action]
    assert bool(jnp.allclose(log_prob, ref_at_action, atol=1e-3, rtol=1e-3))

    # ---- policy (log_prob + entropy of given actions) path ----
    pol_logp, pol_ent = actor_policy(params, states, action, masks)
    jax.block_until_ready((pol_logp, pol_ent))
    assert bool(jnp.allclose(pol_logp, ref_at_action, atol=1e-3, rtol=1e-3))
    ref_p = jnp.exp(ref_logp)
    ref_ent = -jnp.sum(jnp.where(ref_p > 0, ref_p * ref_logp, 0.0), axis=-1)
    assert bool(jnp.allclose(pol_ent, ref_ent, atol=1e-3, rtol=1e-3))

    # ---- masks=None path (matches torch default argument) ----
    a2, lp2 = actor_forward(params, states, k_sample)
    jax.block_until_ready((a2, lp2))
    assert a2.shape == (B,) and bool(jnp.all((a2 >= 0) & (a2 < OUTPUT_DIM)))

    print("KERNEL_OK")
</pallas_src>

<mosaic_0001>
module attributes {stable_mosaic.version = 11 : i64} {
  func.func @actor_kernel(%arg0: i32, %arg1: memref<8x32xf32, #tpu.memory_space<vmem>>, %arg2: memref<8x128xf32, #tpu.memory_space<vmem>>, %arg3: memref<8x128xf32, #tpu.memory_space<vmem>>, %arg4: memref<32x128xf32, #tpu.memory_space<vmem>>, %arg5: memref<1x128xf32, #tpu.memory_space<vmem>>, %arg6: memref<128x128xf32, #tpu.memory_space<vmem>>, %arg7: memref<1x128xf32, #tpu.memory_space<vmem>>, %arg8: memref<128x128xf32, #tpu.memory_space<vmem>>, %arg9: memref<1x128xf32, #tpu.memory_space<vmem>>, %arg10: memref<1x8xi32, #tpu.memory_space<vmem>>, %arg11: memref<1x8xf32, #tpu.memory_space<vmem>>) attributes {dimension_semantics = [#tpu.dimension_semantics<parallel>], iteration_bounds = array<i64: 1>, scalar_prefetch = 0 : i64, scratch_operands = 0 : i64, tpu.core_type = #tpu.core_type<tc>, window_params = [{transform_indices = @transform_0, window_bounds = array<i64: 8, 32>}, {transform_indices = @transform_1, window_bounds = array<i64: 8, 128>}, {transform_indices = @transform_2, window_bounds = array<i64: 8, 128>}, {pipeline_mode = #tpu.pipeline_mode<synchronous>, transform_indices = @transform_3, window_bounds = array<i64: 32, 128>}, {pipeline_mode = #tpu.pipeline_mode<synchronous>, transform_indices = @transform_4, window_bounds = array<i64: 1, 128>}, {pipeline_mode = #tpu.pipeline_mode<synchronous>, transform_indices = @transform_5, window_bounds = array<i64: 128, 128>}, {pipeline_mode = #tpu.pipeline_mode<synchronous>, transform_indices = @transform_6, window_bounds = array<i64: 1, 128>}, {pipeline_mode = #tpu.pipeline_mode<synchronous>, transform_indices = @transform_7, window_bounds = array<i64: 128, 128>}, {pipeline_mode = #tpu.pipeline_mode<synchronous>, transform_indices = @transform_8, window_bounds = array<i64: 1, 128>}, {transform_indices = @transform_9, window_bounds = array<i64: 1, 8>}, {transform_indices = @transform_10, window_bounds = array<i64: 1, 8>}]} {
    %c0 = arith.constant 0 : index
    %c0_0 = arith.constant 0 : index
    %0 = vector.load %arg1[%c0, %c0_0] : memref<8x32xf32, #tpu.memory_space<vmem>>, vector<8x32xf32>
    %c0_1 = arith.constant 0 : index
    %c0_2 = arith.constant 0 : index
    %1 = vector.load %arg4[%c0_1, %c0_2] : memref<32x128xf32, #tpu.memory_space<vmem>>, vector<32x128xf32>
    %cst = arith.constant dense<0.000000e+00> : vector<8x128xf32>
    %2 = tpu.matmul %0, %1, %cst {dimension_numbers = #tpu.dot_dimension_numbers<[1], [0], [0], [1], [0, 0, 1, 1], [], []>} : vector<8x32xf32>, vector<32x128xf32>, vector<8x128xf32> -> vector<8x128xf32>
    %c0_3 = arith.constant 0 : index
    %c0_4 = arith.constant 0 : index
    %3 = vector.load %arg5[%c0_3, %c0_4] : memref<1x128xf32, #tpu.memory_space<vmem>>, vector<1x128xf32>
    %4 = vector.broadcast %3 : vector<1x128xf32> to vector<8x128xf32>
    %5 = arith.addf %2, %4 : vector<8x128xf32>
    %cst_5 = arith.constant 0.000000e+00 : f32
    %6 = vector.broadcast %cst_5 : f32 to vector<8x128xf32>
    %7 = arith.cmpf ogt, %5, %6 : vector<8x128xf32>
    %cst_6 = arith.constant 0.00999999977 : f32
    %8 = vector.broadcast %cst_6 : f32 to vector<8x128xf32>
    %9 = arith.mulf %8, %5 : vector<8x128xf32>
    %10 = arith.select %7, %5, %9 : vector<8x128xi1>, vector<8x128xf32>
    %c0_7 = arith.constant 0 : index
    %c0_8 = arith.constant 0 : index
    %11 = vector.load %arg6[%c0_7, %c0_8] : memref<128x128xf32, #tpu.memory_space<vmem>>, vector<128x128xf32>
    %cst_9 = arith.constant dense<0.000000e+00> : vector<8x128xf32>
    %12 = tpu.matmul %10, %11, %cst_9 {dimension_numbers = #tpu.dot_dimension_numbers<[1], [0], [0], [1], [0, 0, 1, 1], [], []>} : vector<8x128xf32>, vector<128x128xf32>, vector<8x128xf32> -> vector<8x128xf32>
    %c0_10 = arith.constant 0 : index
    %c0_11 = arith.constant 0 : index
    %13 = vector.load %arg7[%c0_10, %c0_11] : memref<1x128xf32, #tpu.memory_space<vmem>>, vector<1x128xf32>
    %14 = vector.broadcast %13 : vector<1x128xf32> to vector<8x128xf32>
    %15 = arith.addf %12, %14 : vector<8x128xf32>
    %cst_12 = arith.constant 0.000000e+00 : f32
    %16 = vector.broadcast %cst_12 : f32 to vector<8x128xf32>
    %17 = arith.cmpf ogt, %15, %16 : vector<8x128xf32>
    %cst_13 = arith.constant 0.00999999977 : f32
    %18 = vector.broadcast %cst_13 : f32 to vector<8x128xf32>
    %19 = arith.mulf %18, %15 : vector<8x128xf32>
    %20 = arith.select %17, %15, %19 : vector<8x128xi1>, vector<8x128xf32>
    %c0_14 = arith.constant 0 : index
    %c0_15 = arith.constant 0 : index
    %21 = vector.load %arg8[%c0_14, %c0_15] : memref<128x128xf32, #tpu.memory_space<vmem>>, vector<128x128xf32>
    %cst_16 = arith.constant dense<0.000000e+00> : vector<8x128xf32>
    %22 = tpu.matmul %20, %21, %cst_16 {dimension_numbers = #tpu.dot_dimension_numbers<[1], [0], [0], [1], [0, 0, 1, 1], [], []>} : vector<8x128xf32>, vector<128x128xf32>, vector<8x128xf32> -> vector<8x128xf32>
    %c0_17 = arith.constant 0 : index
    %c0_18 = arith.constant 0 : index
    %23 = vector.load %arg9[%c0_17, %c0_18] : memref<1x128xf32, #tpu.memory_space<vmem>>, vector<1x128xf32>
    %24 = vector.broadcast %23 : vector<1x128xf32> to vector<8x128xf32>
    %25 = arith.addf %22, %24 : vector<8x128xf32>
    %c0_19 = arith.constant 0 : index
    %c0_20 = arith.constant 0 : index
    %26 = vector.load %arg2[%c0_19, %c0_20] : memref<8x128xf32, #tpu.memory_space<vmem>>, vector<8x128xf32>
    %cst_21 = arith.constant 0.000000e+00 : f32
    %27 = vector.broadcast %cst_21 : f32 to vector<8x128xf32>
    %28 = arith.cmpf one, %26, %27 : vector<8x128xf32>
    %cst_22 = arith.constant -1.000000e+08 : f32
    %29 = vector.broadcast %cst_22 : f32 to vector<8x128xf32>
    %30 = arith.select %28, %25, %29 : vector<8x128xi1>, vector<8x128xf32>
    %cst_23 = arith.constant dense<0xFF800000> : vector<8xf32>
    %31 = vector.multi_reduction <maximumf>, %30, %cst_23 [1] : vector<8x128xf32> to vector<8xf32>
    %32 = vector.shape_cast %31 : vector<8xf32> to vector<8x1xf32>
    %33 = vector.broadcast %32 : vector<8x1xf32> to vector<8x128xf32>
    %34 = arith.subf %30, %33 : vector<8x128xf32>
    %35 = math.exp %34 : vector<8x128xf32>
    %cst_24 = arith.constant dense<0.000000e+00> : vector<8xf32>
    %36 = vector.multi_reduction <add>, %35, %cst_24 [1] : vector<8x128xf32> to vector<8xf32>
    %37 = vector.shape_cast %36 : vector<8xf32> to vector<8x1xf32>
    %38 = math.log %37 : vector<8x1xf32>
    %39 = vector.broadcast %38 : vector<8x1xf32> to vector<8x128xf32>
    %40 = arith.subf %34, %39 : vector<8x128xf32>
    %c0_25 = arith.constant 0 : index
    %c0_26 = arith.constant 0 : index
    %41 = vector.load %arg3[%c0_25, %c0_26] : memref<8x128xf32, #tpu.memory_space<vmem>>, vector<8x128xf32>
    %42 = arith.addf %40, %41 : vector<8x128xf32>
    %43 = tpu.transpose %42, [1, 0] : vector<8x128xf32> -> vector<128x8xf32>
    %44 = tpu.transpose %40, [1, 0] : vector<8x128xf32> -> vector<128x8xf32>
    %cst_27 = arith.constant dense<0xFF800000> : vector<8xf32>
    %45 = vector.multi_reduction <maximumf>, %43, %cst_27 [0] : vector<128x8xf32> to vector<8xf32>
    %46 = vector.shape_cast %45 : vector<8xf32> to vector<1x8xf32>
    %47 = tpu.iota {dimensions = array<i32: 0>} : vector<128x8xi32>
    %48 = vector.broadcast %46 : vector<1x8xf32> to vector<128x8xf32>
    %49 = arith.cmpf oeq, %43, %48 : vector<128x8xf32>
    %c128_i32 = arith.constant 128 : i32
    %50 = vector.broadcast %c128_i32 : i32 to vector<128x8xi32>
    %51 = arith.select %49, %47, %50 : vector<128x8xi1>, vector<128x8xi32>
    %cst_28 = arith.constant dense<2147483647> : vector<8xi32>
    %52 = vector.multi_reduction <minsi>, %51, %cst_28 [0] : vector<128x8xi32> to vector<8xi32>
    %53 = vector.shape_cast %52 : vector<8xi32> to vector<1x8xi32>
    %54 = vector.broadcast %53 : vector<1x8xi32> to vector<128x8xi32>
    %55 = arith.cmpi eq, %47, %54 : vector<128x8xi32>
    %cst_29 = arith.constant 0.000000e+00 : f32
    %56 = vector.broadcast %cst_29 : f32 to vector<128x8xf32>
    %57 = arith.select %55, %44, %56 : vector<128x8xi1>, vector<128x8xf32>
    %cst_30 = arith.constant dense<0.000000e+00> : vector<8xf32>
    %58 = vector.multi_reduction <add>, %57, %cst_30 [0] : vector<128x8xf32> to vector<8xf32>
    %59 = vector.shape_cast %58 : vector<8xf32> to vector<1x8xf32>
    %c0_31 = arith.constant 0 : index
    %c0_32 = arith.constant 0 : index
    %60 = vector.load %arg10[%c0_31, %c0_32] : memref<1x8xi32, #tpu.memory_space<vmem>>, vector<1x8xi32>
    tpu.vector_store %arg10[%c0_31, %c0_32], %53 {strides = array<i32>} : memref<1x8xi32, #tpu.memory_space<vmem>>, vector<1x8xi32>,
    %c0_33 = arith.constant 0 : index
    %c0_34 = arith.constant 0 : index
    %61 = vector.load %arg11[%c0_33, %c0_34] : memref<1x8xf32, #tpu.memory_space<vmem>>, vector<1x8xf32>
    tpu.vector_store %arg11[%c0_33, %c0_34], %59 {strides = array<i32>} : memref<1x8xf32, #tpu.memory_space<vmem>>, vector<1x8xf32>,
    return
  }
  func.func @transform_0(%arg0: i32) -> (i32, i32) {
    %c0_i32 = arith.constant 0 : i32
    %c0_i32_0 = arith.constant 0 : i32
    return %arg0, %c0_i32 : i32, i32
  }
  func.func @transform_1(%arg0: i32) -> (i32, i32) {
    %c0_i32 = arith.constant 0 : i32
    %c0_i32_0 = arith.constant 0 : i32
    return %arg0, %c0_i32 : i32, i32
  }
  func.func @transform_2(%arg0: i32) -> (i32, i32) {
    %c0_i32 = arith.constant 0 : i32
    %c0_i32_0 = arith.constant 0 : i32
    return %arg0, %c0_i32 : i32, i32
  }
  func.func @transform_3(%arg0: i32) -> (i32, i32) {
    %c0_i32 = arith.constant 0 : i32
    %c0_i32_0 = arith.constant 0 : i32
    %c0_i32_1 = arith.constant 0 : i32
    return %c0_i32, %c0_i32_0 : i32, i32
  }
  func.func @transform_4(%arg0: i32) -> (i32, i32) {
    %c0_i32 = arith.constant 0 : i32
    %c0_i32_0 = arith.constant 0 : i32
    %c0_i32_1 = arith.constant 0 : i32
    return %c0_i32, %c0_i32_0 : i32, i32
  }
  func.func @transform_5(%arg0: i32) -> (i32, i32) {
    %c0_i32 = arith.constant 0 : i32
    %c0_i32_0 = arith.constant 0 : i32
    %c0_i32_1 = arith.constant 0 : i32
    return %c0_i32, %c0_i32_0 : i32, i32
  }
  func.func @transform_6(%arg0: i32) -> (i32, i32) {
    %c0_i32 = arith.constant 0 : i32
    %c0_i32_0 = arith.constant 0 : i32
    %c0_i32_1 = arith.constant 0 : i32
    return %c0_i32, %c0_i32_0 : i32, i32
  }
  func.func @transform_7(%arg0: i32) -> (i32, i32) {
    %c0_i32 = arith.constant 0 : i32
    %c0_i32_0 = arith.constant 0 : i32
    %c0_i32_1 = arith.constant 0 : i32
    return %c0_i32, %c0_i32_0 : i32, i32
  }
  func.func @transform_8(%arg0: i32) -> (i32, i32) {
    %c0_i32 = arith.constant 0 : i32
    %c0_i32_0 = arith.constant 0 : i32
    %c0_i32_1 = arith.constant 0 : i32
    return %c0_i32, %c0_i32_0 : i32, i32
  }
  func.func @transform_9(%arg0: i32) -> (i32, i32) {
    %c0_i32 = arith.constant 0 : i32
    %c0_i32_0 = arith.constant 0 : i32
    return %c0_i32, %arg0 : i32, i32
  }
  func.func @transform_10(%arg0: i32) -> (i32, i32) {
    %c0_i32 = arith.constant 0 : i32
    %c0_i32_0 = arith.constant 0 : i32
    return %c0_i32, %arg0 : i32, i32
  }
}

</mosaic_0001>

<llo_original>
// kernel: actor_forward.1
$region0: #{actor_forward.1}
  #allocation0 [shape = 'u32[]', space=smem, size = 0x4, offset = 0x4, fixed_abs, tag = 'smem constant byte address 0x4 - core index']
  #allocation1 [shape = 'u32[144,128]{1,0:T(1,128)}', space=vmem, size = 0x12000, scoped, tag = 'internal scratch']
  %s0 = inlined_call_operand.vmem [shape: f32[8,32], index: 0, kind: input, shape index: {}]
  %s1 = inlined_call_operand.vmem [shape: f32[8,128], index: 1, kind: input, shape index: {}]
  %s2 = inlined_call_operand.vmem [shape: f32[8,128], index: 2, kind: input, shape index: {}]
  %s3 = inlined_call_operand.vmem [shape: f32[32,128], index: 3, kind: input, shape index: {}]
  %s4 = inlined_call_operand.vmem [shape: f32[1,128], index: 4, kind: input, shape index: {}]
  %s5 = inlined_call_operand.hbm [shape: f32[128,128], index: 5, kind: input, shape index: {}]
  %s6 = inlined_call_operand.vmem [shape: f32[1,128], index: 6, kind: input, shape index: {}]
  %s7 = inlined_call_operand.hbm [shape: f32[128,128], index: 7, kind: input, shape index: {}]
  %s8 = inlined_call_operand.vmem [shape: f32[1,128], index: 8, kind: input, shape index: {}]
  %s9 = inlined_call_operand.hbm [shape: s32[1,8], index: 9, kind: output, shape index: {0}]
  %s10 = inlined_call_operand.hbm [shape: f32[1,8], index: 10, kind: output, shape index: {1}]
  %11 = xla_tuple %s9, %s10
  %s12 = sld [smem:[#allocation0]]
  $region62: #{actor_forward.1} parent=0
    _
  %s14 = ssub.s32 1, %s12
  %s15 = scalar_select 0, %s14, %s12
  $region1: #{actor_forward.1} parent=0
    #allocation2 [shape = 'u8[65536]{0}', space=vmem, size = 0x10000, scoped, tag = 'input window, operand 5, single buffered']
    #allocation3 [shape = 's32[1]{0}', space=sflag, size = 0x4, scoped, tag = 'scoped memory for actor_forward.1']
    #allocation4 [shape = 's32[1]{0}', space=sflag, size = 0x4, scoped, tag = 'scoped memory for actor_forward.1']
    #allocation5 [shape = 'u8[65536]{0}', space=vmem, size = 0x10000, scoped, tag = 'input window, operand 7, single buffered']
    #allocation6 [shape = 's32[1]{0}', space=sflag, size = 0x4, scoped, tag = 'scoped memory for actor_forward.1']
    #allocation7 [shape = 'u8[512]{0}', space=vmem, size = 0x400, scoped, tag = 'output window, operand 0, single buffered']
    #allocation8 [shape = 'u8[512]{0}', space=vmem, size = 0x400, scoped, tag = 'output window, operand 1, single buffered']
    #allocation9 [shape = 's32[1]{0}', space=sflag, size = 0x4, scoped, tag = 'scoped memory for actor_forward.1']
    %16 = vsyncpa [#allocation3], 0
    %17 = vsyncpa [#allocation6], 0
    %18 = vsyncpa [#allocation4], 0
    %19 = vsyncpa [#allocation9], 0
    // Predicated region
    $region2: #{actor_forward.1} parent=1 // pred_check
      _
    $region3: #{actor_forward.1} parent=1 // pred_check_branch
      %21 = sbr.rel (0) target = $region5
    $region4: #{actor_forward.1} parent=1 // pred_region
      _
    $region5: #{actor_forward.1} parent=1 // pred_fallthru
      _
    // Predicated region
    $region6: #{actor_forward.1} parent=1 // pred_check
      _
    $region7: #{actor_forward.1} parent=1 // pred_check_branch
      %23 = sbr.rel (0) target = $region9
    $region8: #{actor_forward.1} parent=1 // pred_region
      _
    $region9: #{actor_forward.1} parent=1 // pred_fallthru
      _
    // Predicated region
    $region10: #{actor_forward.1} parent=1 // pred_check
      _
    $region11: #{actor_forward.1} parent=1 // pred_check_branch
      %25 = sbr.rel (0) target = $region13
    $region12: #{actor_forward.1} parent=1 // pred_region
      _
    $region13: #{actor_forward.1} parent=1 // pred_fallthru
      _
    // Predicated region
    $region14: #{actor_forward.1} parent=1 // pred_check
      _
    $region15: #{actor_forward.1} parent=1 // pred_check_branch
      %27 = sbr.rel (0) target = $region17
    $region16: #{actor_forward.1} parent=1 // pred_region
      _
    $region17: #{actor_forward.1} parent=1 // pred_fallthru
      _
    // Predicated region
    $region18: #{actor_forward.1} parent=1 // pred_check
      _
    $region19: #{actor_forward.1} parent=1 // pred_check_branch
      %29 = sbr.rel (0) target = $region21
    $region20: #{actor_forward.1} parent=1 // pred_region
      _
    $region21: #{actor_forward.1} parent=1 // pred_fallthru
      _
    // Predicated region
    $region22: #{actor_forward.1} parent=1 // pred_check
      _
    $region23: #{actor_forward.1} parent=1 // pred_check_branch
      %31 = sbr.rel (0) target = $region25
    $region24: #{actor_forward.1} parent=1 // pred_region
      %s33 = ssub.s32 2048, 2048
      %34 = vsyncadd [#allocation3], %s33
      %s35 = sshll.u32 [#allocation2], 4
      %s36 = int_to_ptr.vmem [resolvable:$true] %s35
      %41 = dma.hbm_to_vmem [thread:$0]  %s5, 2048, %s36, [#allocation3], 128, 128, 8
    $region25: #{actor_forward.1} parent=1 // pred_fallthru
      _
    // Predicated region
    $region26: #{actor_forward.1} parent=1 // pred_check
      _
    $region27: #{actor_forward.1} parent=1 // pred_check_branch
      %43 = sbr.rel (0) target = $region29
    $region28: #{actor_forward.1} parent=1 // pred_region
      _
    $region29: #{actor_forward.1} parent=1 // pred_fallthru
      _
    // Predicated region
    $region30: #{actor_forward.1} parent=1 // pred_check
      _
    $region31: #{actor_forward.1} parent=1 // pred_check_branch
      %45 = sbr.rel (0) target = $region33
    $region32: #{actor_forward.1} parent=1 // pred_region
      %s47 = ssub.s32 2048, 2048
      %48 = vsyncadd [#allocation6], %s47
      %s49 = sshll.u32 [#allocation5], 4
      %s50 = int_to_ptr.vmem [resolvable:$true] %s49
      %55 = dma.hbm_to_vmem [thread:$0]  %s7, 2048, %s50, [#allocation6], 128, 128, 8
    $region33: #{actor_forward.1} parent=1 // pred_fallthru
      _
    // Predicated region
    $region34: #{actor_forward.1} parent=1 // pred_check
      _
    $region35: #{actor_forward.1} parent=1 // pred_check_branch
      %57 = sbr.rel (0) target = $region37
    $region36: #{actor_forward.1} parent=1 // pred_region
      _
    $region37: #{actor_forward.1} parent=1 // pred_fallthru
      _
    // Predicated region
    $region38: #{actor_forward.1} parent=1 // pred_check
      _
    $region39: #{actor_forward.1} parent=1 // pred_check_branch
      %59 = sbr.rel (0) target = $region41
    $region40: #{actor_forward.1} parent=1 // pred_region
      %60 = dma.done [#allocation3], 2048
    $region41: #{actor_forward.1} parent=1 // pred_fallthru
      _
    // Predicated region
    $region42: #{actor_forward.1} parent=1 // pred_check
      _
    $region43: #{actor_forward.1} parent=1 // pred_check_branch
      %62 = sbr.rel (0) target = $region45
    $region44: #{actor_forward.1} parent=1 // pred_region
      %63 = dma.done [#allocation6], 2048
    $region45: #{actor_forward.1} parent=1 // pred_fallthru
      _
    %v64 = vld [vmem:[%s0] sm:$0xff]
    %v65 = vld [vmem:[%s3] sm:$0xff]
    %v66 = vld [vmem:[%s3 + $0x8] sm:$0xff]
    %v67 = vld [vmem:[%s3 + $0x10] sm:$0xff]
    %v68 = vld [vmem:[%s3 + $0x18] sm:$0xff]
    %v69 = vld [vmem:[%s4] sm:$0x1]
    %v71 = vlaneseq
    %v72 = vshrl.u32 %v71, 7
    %v73 = vsub.s32 0, %v72
    %v74 = vrot.slane %v69, %v73
    %vm76 = vcmask 261120
    %v78 = vsel %vm76, %v64, 0
    %80 = vmatprep.subr.mxu0 0.0
    %81 = vmatpush1.msra.mxu0 %v65
    %82 = vmatprep.subr.mxu0 0.0
    %83 = vmatpush1.msra.mxu0 %v66
    %84 = vmatprep.subr.mxu0 0.0
    %85 = vmatpush1.msra.mxu0 %v67
    %86 = vmatprep.subr.mxu0 0.0
    %87 = vmatpush1.msra.mxu0 %v68
    %88 = vmatprep.subr.mxu0 0.0
    %89 = vmatpush1.msra.mxu0 0.0
    %90 = vmatprep.subr.mxu0 0.0
    %91 = vmatpush1.msra.mxu0 0.0
    %92 = vmatprep.subr.mxu0 0.0
    %93 = vmatpush1.msra.mxu0 0.0
    %94 = vmatprep.subr.mxu0 0.0
    %95 = vmatpush1.msra.mxu0 0.0
    %96 = vmatprep.subr.mxu0 0.0
    %97 = vmatpush1.msra.mxu0 0.0
    %98 = vmatprep.subr.mxu0 0.0
    %99 = vmatpush1.msra.mxu0 0.0
    %100 = vmatprep.subr.mxu0 0.0
    %101 = vmatpush1.msra.mxu0 0.0
    %102 = vmatprep.subr.mxu0 0.0
    %103 = vmatpush1.msra.mxu0 0.0
    %104 = vmatprep.subr.mxu0 0.0
    %105 = vmatpush1.msra.mxu0 0.0
    %106 = vmatprep.subr.mxu0 0.0
    %107 = vmatpush1.msra.mxu0 0.0
    %108 = vmatprep.subr.mxu0 0.0
    %109 = vmatpush1.msra.mxu0 0.0
    %110 = vmatprep.subr.mxu0 0.0
    %111 = vmatpush1.msra.mxu0 0.0
    %112 = vmatprep.subr.mxu0 0.0
    %113 = vmatpush1.msra.mxu0 0.0
    %114 = vmatprep.subr.mxu0 0.0
    %115 = vmatpush1.msra.mxu0 0.0
    %116 = vmatprep.subr.mxu0 0.0
    %117 = vmatpush1.msra.mxu0 0.0
    %118 = vmatprep.subr.mxu0 0.0
    %119 = vmatpush1.msra.mxu0 0.0
    %120 = vmatprep.subr.mxu0 0.0
    %121 = vmatpush1.msra.mxu0 0.0
    %122 = vmatprep.subr.mxu0 0.0
    %123 = vmatpush1.msra.mxu0 0.0
    %124 = vmatprep.subr.mxu0 0.0
    %125 = vmatpush1.msra.mxu0 0.0
    %126 = vmatprep.subr.mxu0 0.0
    %127 = vmatpush1.msra.mxu0 0.0
    %128 = vmatprep.subr.mxu0 0.0
    %129 = vmatpush1.msra.mxu0 0.0
    %130 = vmatprep.subr.mxu0 0.0
    %131 = vmatpush1.msra.mxu0 0.0
    %132 = vmatprep.subr.mxu0 0.0
    %133 = vmatpush1.msra.mxu0 0.0
    %134 = vmatprep.subr.mxu0 0.0
    %135 = vmatpush1.msra.mxu0 0.0
    %136 = vmatprep.subr.mxu0 0.0
    %137 = vmatpush1.msra.mxu0 0.0
    %138 = vmatprep.subr.mxu0 0.0
    %139 = vmatpush1.msra.mxu0 0.0
    %140 = vmatprep.subr.mxu0 0.0
    %141 = vmatpush1.msra.mxu0 0.0
    %142 = vmatprep.subr.mxu0 0.0
    %143 = vmatpush1.msra.mxu0 0.0
    %144 = vmatprep.mubr.f32.mxu0 0.0
    %145 = vmatmul.mubr.f32.gmra.mrb[0].mxu0 %v78
    %v146 = vpop.f32.mrb[0].mxu0
    %v147 = vadd.f32 %v74, %v146
    %v148 = vpop.f32.mrb[0].mxu0
    %149 = vdwg.mxu0
    %vm150 = vcmp.gt.f32.partialorder %v147, 0.0
    %v151 = vmul.f32 %v147, 0.01
    %v152 = vsel %vm150, %v147, %v151
    %v153 = vld [vmem:[#allocation2] sm:$0xff]
    %v154 = vld [vmem:[#allocation2 + $0x8] sm:$0xff]
    %v155 = vld [vmem:[#allocation2 + $0x10] sm:$0xff]
    %v156 = vld [vmem:[#allocation2 + $0x18] sm:$0xff]
    %v157 = vld [vmem:[#allocation2 + $0x20] sm:$0xff]
    %v158 = vld [vmem:[#allocation2 + $0x28] sm:$0xff]
    %v159 = vld [vmem:[#allocation2 + $0x30] sm:$0xff]
    %v160 = vld [vmem:[#allocation2 + $0x38] sm:$0xff]
    %v161 = vld [vmem:[#allocation2 + $0x40] sm:$0xff]
    %v162 = vld [vmem:[#allocation2 + $0x48] sm:$0xff]
    %v163 = vld [vmem:[#allocation2 + $0x50] sm:$0xff]
    %v164 = vld [vmem:[#allocation2 + $0x58] sm:$0xff]
    %v165 = vld [vmem:[#allocation2 + $0x60] sm:$0xff]
    %v166 = vld [vmem:[#allocation2 + $0x68] sm:$0xff]
    %v167 = vld [vmem:[#allocation2 + $0x70] sm:$0xff]
    %v168 = vld [vmem:[#allocation2 + $0x78] sm:$0xff]
    %v169 = vld [vmem:[%s6] sm:$0x1]
    %v171 = vlaneseq
    %v172 = vshrl.u32 %v171, 7
    %v173 = vsub.s32 0, %v172
    %v174 = vrot.slane %v169, %v173
    %176 = vmatprep.subr.mxu0 0.0
    %177 = vmatpush1.msra.mxu0 %v153
    %178 = vmatprep.subr.mxu0 0.0
    %179 = vmatpush1.msra.mxu0 %v154
    %180 = vmatprep.subr.mxu0 0.0
    %181 = vmatpush1.msra.mxu0 %v155
    %182 = vmatprep.subr.mxu0 0.0
    %183 = vmatpush1.msra.mxu0 %v156
    %184 = vmatprep.subr.mxu0 0.0
    %185 = vmatpush1.msra.mxu0 %v157
    %186 = vmatprep.subr.mxu0 0.0
    %187 = vmatpush1.msra.mxu0 %v158
    %188 = vmatprep.subr.mxu0 0.0
    %189 = vmatpush1.msra.mxu0 %v159
    %190 = vmatprep.subr.mxu0 0.0
    %191 = vmatpush1.msra.mxu0 %v160
    %192 = vmatprep.subr.mxu0 0.0
    %193 = vmatpush1.msra.mxu0 %v161
    %194 = vmatprep.subr.mxu0 0.0
    %195 = vmatpush1.msra.mxu0 %v162
    %196 = vmatprep.subr.mxu0 0.0
    %197 = vmatpush1.msra.mxu0 %v163
    %198 = vmatprep.subr.mxu0 0.0
    %199 = vmatpush1.msra.mxu0 %v164
    %200 = vmatprep.subr.mxu0 0.0
    %201 = vmatpush1.msra.mxu0 %v165
    %202 = vmatprep.subr.mxu0 0.0
    %203 = vmatpush1.msra.mxu0 %v166
    %204 = vmatprep.subr.mxu0 0.0
    %205 = vmatpush1.msra.mxu0 %v167
    %206 = vmatprep.subr.mxu0 0.0
    %207 = vmatpush1.msra.mxu0 %v168
    %208 = vmatprep.subr.mxu0 0.0
    %209 = vmatpush1.msra.mxu0 0.0
    %210 = vmatprep.subr.mxu0 0.0
    %211 = vmatpush1.msra.mxu0 0.0
    %212 = vmatprep.subr.mxu0 0.0
    %213 = vmatpush1.msra.mxu0 0.0
    %214 = vmatprep.subr.mxu0 0.0
    %215 = vmatpush1.msra.mxu0 0.0
    %216 = vmatprep.subr.mxu0 0.0
    %217 = vmatpush1.msra.mxu0 0.0
    %218 = vmatprep.subr.mxu0 0.0
    %219 = vmatpush1.msra.mxu0 0.0
    %220 = vmatprep.subr.mxu0 0.0
    %221 = vmatpush1.msra.mxu0 0.0
    %222 = vmatprep.subr.mxu0 0.0
    %223 = vmatpush1.msra.mxu0 0.0
    %224 = vmatprep.subr.mxu0 0.0
    %225 = vmatpush1.msra.mxu0 0.0
    %226 = vmatprep.subr.mxu0 0.0
    %227 = vmatpush1.msra.mxu0 0.0
    %228 = vmatprep.subr.mxu0 0.0
    %229 = vmatpush1.msra.mxu0 0.0
    %230 = vmatprep.subr.mxu0 0.0
    %231 = vmatpush1.msra.mxu0 0.0
    %232 = vmatprep.subr.mxu0 0.0
    %233 = vmatpush1.msra.mxu0 0.0
    %234 = vmatprep.subr.mxu0 0.0
    %235 = vmatpush1.msra.mxu0 0.0
    %236 = vmatprep.subr.mxu0 0.0
    %237 = vmatpush1.msra.mxu0 0.0
    %238 = vmatprep.subr.mxu0 0.0
    %239 = vmatpush1.msra.mxu0 0.0
    %240 = vmatprep.mubr.f32.mxu0 0.0
    %241 = vmatmul.mubr.f32.gmra.mrb[0].mxu0 %v152
    %v242 = vpop.f32.mrb[0].mxu0
    %v243 = vadd.f32 %v174, %v242
    %v244 = vpop.f32.mrb[0].mxu0
    %245 = vdwg.mxu0
    %vm246 = vcmp.gt.f32.partialorder %v243, 0.0
    %v247 = vmul.f32 %v243, 0.01
    %v248 = vsel %vm246, %v243, %v247
    %v249 = vld [vmem:[#allocation5] sm:$0xff]
    %v250 = vld [vmem:[#allocation5 + $0x8] sm:$0xff]
    %v251 = vld [vmem:[#allocation5 + $0x10] sm:$0xff]
    %v252 = vld [vmem:[#allocation5 + $0x18] sm:$0xff]
    %v253 = vld [vmem:[#allocation5 + $0x20] sm:$0xff]
    %v254 = vld [vmem:[#allocation5 + $0x28] sm:$0xff]
    %v255 = vld [vmem:[#allocation5 + $0x30] sm:$0xff]
    %v256 = vld [vmem:[#allocation5 + $0x38] sm:$0xff]
    %v257 = vld [vmem:[#allocation5 + $0x40] sm:$0xff]
    %v258 = vld [vmem:[#allocation5 + $0x48] sm:$0xff]
    %v259 = vld [vmem:[#allocation5 + $0x50] sm:$0xff]
    %v260 = vld [vmem:[#allocation5 + $0x58] sm:$0xff]
    %v261 = vld [vmem:[#allocation5 + $0x60] sm:$0xff]
    %v262 = vld [vmem:[#allocation5 + $0x68] sm:$0xff]
    %v263 = vld [vmem:[#allocation5 + $0x70] sm:$0xff]
    %v264 = vld [vmem:[#allocation5 + $0x78] sm:$0xff]
    %v265 = vld [vmem:[%s8] sm:$0x1]
    %v267 = vlaneseq
    %v268 = vshrl.u32 %v267, 7
    %v269 = vsub.s32 0, %v268
    %v270 = vrot.slane %v265, %v269
    %272 = vmatprep.subr.mxu0 0.0
    %273 = vmatpush1.msra.mxu0 %v249
    %274 = vmatprep.subr.mxu0 0.0
    %275 = vmatpush1.msra.mxu0 %v250
    %276 = vmatprep.subr.mxu0 0.0
    %277 = vmatpush1.msra.mxu0 %v251
    %278 = vmatprep.subr.mxu0 0.0
    %279 = vmatpush1.msra.mxu0 %v252
    %280 = vmatprep.subr.mxu0 0.0
    %281 = vmatpush1.msra.mxu0 %v253
    %282 = vmatprep.subr.mxu0 0.0
    %283 = vmatpush1.msra.mxu0 %v254
    %284 = vmatprep.subr.mxu0 0.0
    %285 = vmatpush1.msra.mxu0 %v255
    %286 = vmatprep.subr.mxu0 0.0
    %287 = vmatpush1.msra.mxu0 %v256
    %288 = vmatprep.subr.mxu0 0.0
    %289 = vmatpush1.msra.mxu0 %v257
    %290 = vmatprep.subr.mxu0 0.0
    %291 = vmatpush1.msra.mxu0 %v258
    %292 = vmatprep.subr.mxu0 0.0
    %293 = vmatpush1.msra.mxu0 %v259
    %294 = vmatprep.subr.mxu0 0.0
    %295 = vmatpush1.msra.mxu0 %v260
    %296 = vmatprep.subr.mxu0 0.0
    %297 = vmatpush1.msra.mxu0 %v261
    %298 = vmatprep.subr.mxu0 0.0
    %299 = vmatpush1.msra.mxu0 %v262
    %300 = vmatprep.subr.mxu0 0.0
    %301 = vmatpush1.msra.mxu0 %v263
    %302 = vmatprep.subr.mxu0 0.0
    %303 = vmatpush1.msra.mxu0 %v264
    %304 = vmatprep.subr.mxu0 0.0
    %305 = vmatpush1.msra.mxu0 0.0
    %306 = vmatprep.subr.mxu0 0.0
    %307 = vmatpush1.msra.mxu0 0.0
    %308 = vmatprep.subr.mxu0 0.0
    %309 = vmatpush1.msra.mxu0 0.0
    %310 = vmatprep.subr.mxu0 0.0
    %311 = vmatpush1.msra.mxu0 0.0
    %312 = vmatprep.subr.mxu0 0.0
    %313 = vmatpush1.msra.mxu0 0.0
    %314 = vmatprep.subr.mxu0 0.0
    %315 = vmatpush1.msra.mxu0 0.0
    %316 = vmatprep.subr.mxu0 0.0
    %317 = vmatpush1.msra.mxu0 0.0
    %318 = vmatprep.subr.mxu0 0.0
    %319 = vmatpush1.msra.mxu0 0.0
    %320 = vmatprep.subr.mxu0 0.0
    %321 = vmatpush1.msra.mxu0 0.0
    %322 = vmatprep.subr.mxu0 0.0
    %323 = vmatpush1.msra.mxu0 0.0
    %324 = vmatprep.subr.mxu0 0.0
    %325 = vmatpush1.msra.mxu0 0.0
    %326 = vmatprep.subr.mxu0 0.0
    %327 = vmatpush1.msra.mxu0 0.0
    %328 = vmatprep.subr.mxu0 0.0
    %329 = vmatpush1.msra.mxu0 0.0
    %330 = vmatprep.subr.mxu0 0.0
    %331 = vmatpush1.msra.mxu0 0.0
    %332 = vmatprep.subr.mxu0 0.0
    %333 = vmatpush1.msra.mxu0 0.0
    %334 = vmatprep.subr.mxu0 0.0
    %335 = vmatpush1.msra.mxu0 0.0
    %336 = vmatprep.mubr.f32.mxu0 0.0
    %337 = vmatmul.mubr.f32.gmra.mrb[0].mxu0 %v248
    %v338 = vpop.f32.mrb[0].mxu0
    %v339 = vadd.f32 %v270, %v338
    %v340 = vpop.f32.mrb[0].mxu0
    %341 = vdwg.mxu0
    %v342 = vld [vmem:[%s1] sm:$0xff]
    %vm343 = vcmp.ne.f32.partialorder %v342, 0.0
    %v344 = vsel %vm343, %v339, -1e+08
    %345 = vmax.xlane.f32.xlu0 %v344
    %v346 = vpop.xlane.xlu0 %345
    %v347 = vsub.f32 %v344, %v346
    %v348 = vmul.f32 %v347, 1.442695
    %v349 = vpow.pop %v348
    %350 = vadd.xlane.f32.xlu0 %v349
    %v351 = vpop.xlane.xlu0 %350
    %v352 = vlog2.pop %v351
    %v353 = vmul.f32 %v352, 0.6931472
    %v354 = vsub.f32 %v347, %v353
    %v355 = vld [vmem:[%s2] sm:$0xff]
    %v356 = vadd.f32 %v354, %v355
    %357 = vxpose.xlu0.b32.start [1/16] %v356, 128
    %358 = vxpose.xlu0.b32.cont [2/16] 0.0, 128
    %359 = vxpose.xlu0.b32.cont [3/16] 0.0, 128
    %360 = vxpose.xlu0.b32.cont [4/16] 0.0, 128
    %361 = vxpose.xlu0.b32.cont [5/16] 0.0, 128
    %362 = vxpose.xlu0.b32.cont [6/16] 0.0, 128
    %363 = vxpose.xlu0.b32.cont [7/16] 0.0, 128
    %364 = vxpose.xlu0.b32.cont [8/16] 0.0, 128
    %365 = vxpose.xlu0.b32.cont [9/16] 0.0, 128
    %366 = vxpose.xlu0.b32.cont [10/16] 0.0, 128
    %367 = vxpose.xlu0.b32.cont [11/16] 0.0, 128
    %368 = vxpose.xlu0.b32.cont [12/16] 0.0, 128
    %369 = vxpose.xlu0.b32.cont [13/16] 0.0, 128
    %370 = vxpose.xlu0.b32.cont [14/16] 0.0, 128
    %371 = vxpose.xlu0.b32.cont [15/16] 0.0, 128
    %372 = vxpose.xlu0.b32.end [16/16] 0.0, 128
    %v373 = vpop.trf.xlu0
    %v374 = vpop.trf.xlu0
    %v375 = vpop.trf.xlu0
    %v376 = vpop.trf.xlu0
    %v377 = vpop.trf.xlu0
    %v378 = vpop.trf.xlu0
    %v379 = vpop.trf.xlu0
    %v380 = vpop.trf.xlu0
    %v381 = vpop.trf.xlu0
    %v382 = vpop.trf.xlu0
    %v383 = vpop.trf.xlu0
    %v384 = vpop.trf.xlu0
    %v385 = vpop.trf.xlu0
    %v386 = vpop.trf.xlu0
    %v387 = vpop.trf.xlu0
    %v388 = vpop.trf.xlu0
    %389 = vxpose.xlu0.b32.start [1/16] %v354, 128
    %390 = vxpose.xlu0.b32.cont [2/16] 0.0, 128
    %391 = vxpose.xlu0.b32.cont [3/16] 0.0, 128
    %392 = vxpose.xlu0.b32.cont [4/16] 0.0, 128
    %393 = vxpose.xlu0.b32.cont [5/16] 0.0, 128
    %394 = vxpose.xlu0.b32.cont [6/16] 0.0, 128
    %395 = vxpose.xlu0.b32.cont [7/16] 0.0, 128
    %396 = vxpose.xlu0.b32.cont [8/16] 0.0, 128
    %397 = vxpose.xlu0.b32.cont [9/16] 0.0, 128
    %398 = vxpose.xlu0.b32.cont [10/16] 0.0, 128
    %399 = vxpose.xlu0.b32.cont [11/16] 0.0, 128
    %400 = vxpose.xlu0.b32.cont [12/16] 0.0, 128
    %401 = vxpose.xlu0.b32.cont [13/16] 0.0, 128
    %402 = vxpose.xlu0.b32.cont [14/16] 0.0, 128
    %403 = vxpose.xlu0.b32.cont [15/16] 0.0, 128
    %404 = vxpose.xlu0.b32.end [16/16] 0.0, 128
    %v405 = vpop.trf.xlu0
    %v406 = vpop.trf.xlu0
    %v407 = vpop.trf.xlu0
    %v408 = vpop.trf.xlu0
    %v409 = vpop.trf.xlu0
    %v410 = vpop.trf.xlu0
    %v411 = vpop.trf.xlu0
    %v412 = vpop.trf.xlu0
    %v413 = vpop.trf.xlu0
    %v414 = vpop.trf.xlu0
    %v415 = vpop.trf.xlu0
    %v416 = vpop.trf.xlu0
    %v417 = vpop.trf.xlu0
    %v418 = vpop.trf.xlu0
    %v419 = vpop.trf.xlu0
    %v420 = vpop.trf.xlu0
    %vm421 = vcmask 64512
    %v422 = vsel %vm421, %v373, -inf
    %v423 = vsel %vm421, %v374, -inf
    %v424 = vsel %vm421, %v375, -inf
    %v425 = vsel %vm421, %v376, -inf
    %v426 = vsel %vm421, %v377, -inf
    %v427 = vmax.f32 %v422, %v426
    %v428 = vsel %vm421, %v378, -inf
    %v429 = vmax.f32 %v423, %v428
    %v430 = vsel %vm421, %v379, -inf
    %v431 = vmax.f32 %v424, %v430
    %v432 = vsel %vm421, %v380, -inf
    %v433 = vmax.f32 %v425, %v432
    %v434 = vsel %vm421, %v381, -inf
    %v435 = vmax.f32 %v427, %v434
    %v436 = vsel %vm421, %v382, -inf
    %v437 = vmax.f32 %v429, %v436
    %v438 = vsel %vm421, %v383, -inf
    %v439 = vmax.f32 %v431, %v438
    %v440 = vsel %vm421, %v384, -inf
    %v441 = vmax.f32 %v433, %v440
    %v442 = vsel %vm421, %v385, -inf
    %v443 = vmax.f32 %v435, %v442
    %v444 = vsel %vm421, %v386, -inf
    %v445 = vmax.f32 %v437, %v444
    %v446 = vsel %vm421, %v387, -inf
    %v447 = vmax.f32 %v439, %v446
    %v448 = vsel %vm421, %v388, -inf
    %v449 = vmax.f32 %v441, %v448
    %v450 = vmax.f32 %v443, %v445
    %v451 = vmax.f32 %v447, %v449
    %v452 = vmax.f32 %v450, %v451
    %v453 = vrot.slane %v452, 4
    %v454 = vmax.f32 %v452, %v453
    %v455 = vrot.slane %v454, 2
    %v456 = vmax.f32 %v454, %v455
    %v457 = vrot.slane %v456, 1
    %v458 = vmax.f32 %v456, %v457
    %v459 = vlaneseq
    %v460 = vshrl.u32 %v459, 7
    %v461 = vadd.s32 %v460, 8
    %v462 = vadd.s32 %v460, 16
    %v463 = vadd.s32 %v460, 24
    %v464 = vadd.s32 %v460, 32
    %v465 = vadd.s32 %v460, 40
    %v466 = vadd.s32 %v460, 48
    %v467 = vadd.s32 %v460, 56
    %v468 = vadd.s32 %v460, 64
    %v469 = vadd.s32 %v460, 72
    %v470 = vadd.s32 %v460, 80
    %v471 = vadd.s32 %v460, 88
    %v472 = vadd.s32 %v460, 96
    %v473 = vadd.s32 %v460, 104
    %v474 = vadd.s32 %v460, 112
    %v475 = vadd.s32 %v460, 120
    %vm476 = vcmp.eq.f32.partialorder %v373, %v458
    %vm477 = vcmp.eq.f32.partialorder %v374, %v458
    %vm478 = vcmp.eq.f32.partialorder %v375, %v458
    %vm479 = vcmp.eq.f32.partialorder %v376, %v458
    %vm480 = vcmp.eq.f32.partialorder %v377, %v458
    %vm481 = vcmp.eq.f32.partialorder %v378, %v458
    %vm482 = vcmp.eq.f32.partialorder %v379, %v458
    %vm483 = vcmp.eq.f32.partialorder %v380, %v458
    %vm484 = vcmp.eq.f32.partialorder %v381, %v458
    %vm485 = vcmp.eq.f32.partialorder %v382, %v458
    %vm486 = vcmp.eq.f32.partialorder %v383, %v458
    %vm487 = vcmp.eq.f32.partialorder %v384, %v458
    %vm488 = vcmp.eq.f32.partialorder %v385, %v458
    %vm489 = vcmp.eq.f32.partialorder %v386, %v458
    %vm490 = vcmp.eq.f32.partialorder %v387, %v458
    %vm491 = vcmp.eq.f32.partialorder %v388, %v458
    %v492 = vsel %vm476, %v460, 128
    %v493 = vsel %vm477, %v461, 128
    %v494 = vsel %vm478, %v462, 128
    %v495 = vsel %vm479, %v463, 128
    %v496 = vsel %vm480, %v464, 128
    %v497 = vsel %vm481, %v465, 128
    %v498 = vsel %vm482, %v466, 128
    %v499 = vsel %vm483, %v467, 128
    %v500 = vsel %vm484, %v468, 128
    %v501 = vsel %vm485, %v469, 128
    %v502 = vsel %vm486, %v470, 128
    %v503 = vsel %vm487, %v471, 128
    %v504 = vsel %vm488, %v472, 128
    %v505 = vsel %vm489, %v473, 128
    %v506 = vsel %vm490, %v474, 128
    %v507 = vsel %vm491, %v475, 128
    %v508 = vsel %vm421, %v492, 2147483647
    %v509 = vsel %vm421, %v493, 2147483647
    %v510 = vsel %vm421, %v494, 2147483647
    %v511 = vsel %vm421, %v495, 2147483647
    %v512 = vsel %vm421, %v496, 2147483647
    %vm513 = vcmp.lt.s32.totalorder %v508, %v512
    %v514 = vsel %vm513, %v508, %v512
    %v515 = vsel %vm421, %v497, 2147483647
    %vm516 = vcmp.lt.s32.totalorder %v509, %v515
    %v517 = vsel %vm516, %v509, %v515
    %v518 = vsel %vm421, %v498, 2147483647
    %vm519 = vcmp.lt.s32.totalorder %v510, %v518
    %v520 = vsel %vm519, %v510, %v518
    %v521 = vsel %vm421, %v499, 2147483647
    %vm522 = vcmp.lt.s32.totalorder %v511, %v521
    %v523 = vsel %vm522, %v511, %v521
    %v524 = vsel %vm421, %v500, 2147483647
    %vm525 = vcmp.lt.s32.totalorder %v514, %v524
    %v526 = vsel %vm525, %v514, %v524
    %v527 = vsel %vm421, %v501, 2147483647
    %vm528 = vcmp.lt.s32.totalorder %v517, %v527
    %v529 = vsel %vm528, %v517, %v527
    %v530 = vsel %vm421, %v502, 2147483647
    %vm531 = vcmp.lt.s32.totalorder %v520, %v530
    %v532 = vsel %vm531, %v520, %v530
    %v533 = vsel %vm421, %v503, 2147483647
    %vm534 = vcmp.lt.s32.totalorder %v523, %v533
    %v535 = vsel %vm534, %v523, %v533
    %v536 = vsel %vm421, %v504, 2147483647
    %vm537 = vcmp.lt.s32.totalorder %v526, %v536
    %v538 = vsel %vm537, %v526, %v536
    %v539 = vsel %vm421, %v505, 2147483647
    %vm540 = vcmp.lt.s32.totalorder %v529, %v539
    %v541 = vsel %vm540, %v529, %v539
    %v542 = vsel %vm421, %v506, 2147483647
    %vm543 = vcmp.lt.s32.totalorder %v532, %v542
    %v544 = vsel %vm543, %v532, %v542
    %v545 = vsel %vm421, %v507, 2147483647
    %vm546 = vcmp.lt.s32.totalorder %v535, %v545
    %v547 = vsel %vm546, %v535, %v545
    %vm548 = vcmp.lt.s32.totalorder %v538, %v541
    %v549 = vsel %vm548, %v538, %v541
    %vm550 = vcmp.lt.s32.totalorder %v544, %v547
    %v551 = vsel %vm550, %v544, %v547
    %vm552 = vcmp.lt.s32.totalorder %v549, %v551
    %v553 = vsel %vm552, %v549, %v551
    %v554 = vrot.slane %v553, 4
    %vm555 = vcmp.lt.s32.totalorder %v553, %v554
    %v556 = vsel %vm555, %v553, %v554
    %v557 = vrot.slane %v556, 2
    %vm558 = vcmp.lt.s32.totalorder %v556, %v557
    %v559 = vsel %vm558, %v556, %v557
    %v560 = vrot.slane %v559, 1
    %vm561 = vcmp.lt.s32.totalorder %v559, %v560
    %v562 = vsel %vm561, %v559, %v560
    %vm563 = vcmp.eq.s32.totalorder %v460, %v562
    %vm564 = vcmp.eq.s32.totalorder %v461, %v562
    %vm565 = vcmp.eq.s32.totalorder %v462, %v562
    %vm566 = vcmp.eq.s32.totalorder %v463, %v562
    %vm567 = vcmp.eq.s32.totalorder %v464, %v562
    %vm568 = vcmp.eq.s32.totalorder %v465, %v562
    %vm569 = vcmp.eq.s32.totalorder %v466, %v562
    %vm570 = vcmp.eq.s32.totalorder %v467, %v562
    %vm571 = vcmp.eq.s32.totalorder %v468, %v562
    %vm572 = vcmp.eq.s32.totalorder %v469, %v562
    %vm573 = vcmp.eq.s32.totalorder %v470, %v562
    %vm574 = vcmp.eq.s32.totalorder %v471, %v562
    %vm575 = vcmp.eq.s32.totalorder %v472, %v562
    %vm576 = vcmp.eq.s32.totalorder %v473, %v562
    %vm577 = vcmp.eq.s32.totalorder %v474, %v562
    %vm578 = vcmp.eq.s32.totalorder %v475, %v562
    %v579 = vsel %vm563, %v405, 0.0
    %v580 = vsel %vm564, %v406, 0.0
    %v581 = vsel %vm565, %v407, 0.0
    %v582 = vsel %vm566, %v408, 0.0
    %v583 = vsel %vm567, %v409, 0.0
    %v584 = vsel %vm568, %v410, 0.0
    %v585 = vsel %vm569, %v411, 0.0
    %v586 = vsel %vm570, %v412, 0.0
    %v587 = vsel %vm571, %v413, 0.0
    %v588 = vsel %vm572, %v414, 0.0
    %v589 = vsel %vm573, %v415, 0.0
    %v590 = vsel %vm574, %v416, 0.0
    %v591 = vsel %vm575, %v417, 0.0
    %v592 = vsel %vm576, %v418, 0.0
    %v593 = vsel %vm577, %v419, 0.0
    %v594 = vsel %vm578, %v420, 0.0
    %v595 = vsel %vm421, %v579, 0.0
    %v596 = vsel %vm421, %v580, 0.0
    %v597 = vadd.f32 %v595, %v596
    %v598 = vsel %vm421, %v581, 0.0
    %v599 = vadd.f32 %v597, %v598
    %v600 = vsel %vm421, %v582, 0.0
    %v601 = vadd.f32 %v599, %v600
    %v602 = vsel %vm421, %v583, 0.0
    %v603 = vadd.f32 %v601, %v602
    %v604 = vsel %vm421, %v584, 0.0
    %v605 = vadd.f32 %v603, %v604
    %v606 = vsel %vm421, %v585, 0.0
    %v607 = vadd.f32 %v605, %v606
    %v608 = vsel %vm421, %v586, 0.0
    %v609 = vadd.f32 %v607, %v608
    %v610 = vsel %vm421, %v587, 0.0
    %v611 = vadd.f32 %v609, %v610
    %v612 = vsel %vm421, %v588, 0.0
    %v613 = vadd.f32 %v611, %v612
    %v614 = vsel %vm421, %v589, 0.0
    %v615 = vadd.f32 %v613, %v614
    %v616 = vsel %vm421, %v590, 0.0
    %v617 = vadd.f32 %v615, %v616
    %v618 = vsel %vm421, %v591, 0.0
    %v619 = vadd.f32 %v617, %v618
    %v620 = vsel %vm421, %v592, 0.0
    %v621 = vadd.f32 %v619, %v620
    %v622 = vsel %vm421, %v593, 0.0
    %v623 = vadd.f32 %v621, %v622
    %v624 = vsel %vm421, %v594, 0.0
    %v625 = vadd.f32 %v623, %v624
    %v626 = vrot.slane %v625, 4
    %v627 = vadd.f32 %v625, %v626
    %v628 = vrot.slane %v627, 2
    %v629 = vadd.f32 %v627, %v628
    %v630 = vrot.slane %v629, 1
    %v631 = vadd.f32 %v629, %v630
    %vm632 = vcmask 57344
    %633 = vst.msk [vmem:[#allocation7] sm:$0x1] %vm632, %v562
    %634 = vst.msk [vmem:[#allocation8] sm:$0x1] %vm632, %v631
    // Predicated region
    $region46: #{actor_forward.1} parent=1 // pred_check
      _
    $region47: #{actor_forward.1} parent=1 // pred_check_branch
      %636 = sbr.rel (0) target = $region49
    $region48: #{actor_forward.1} parent=1 // pred_region
      %s638 = ssub.s32 16, 16
      %639 = vsyncadd [#allocation4], %s638
      %s641 = sshll.u32 [#allocation7], 4
      %s642 = int_to_ptr.vmem [resolvable:$true] %s641
      %644 = dma.vmem_to_hbm [thread:$0]  %s642, 16, %s9, [#allocation4]
    $region49: #{actor_forward.1} parent=1 // pred_fallthru
      _
    // Predicated region
    $region50: #{actor_forward.1} parent=1 // pred_check
      _
    $region51: #{actor_forward.1} parent=1 // pred_check_branch
      %646 = sbr.rel (0) target = $region53
    $region52: #{actor_forward.1} parent=1 // pred_region
      %s648 = ssub.s32 16, 16
      %649 = vsyncadd [#allocation9], %s648
      %s651 = sshll.u32 [#allocation8], 4
      %s652 = int_to_ptr.vmem [resolvable:$true] %s651
      %654 = dma.vmem_to_hbm [thread:$0]  %s652, 16, %s10, [#allocation9]
    $region53: #{actor_forward.1} parent=1 // pred_fallthru
      _
    // Predicated region
    $region54: #{actor_forward.1} parent=1 // pred_check
      _
    $region55: #{actor_forward.1} parent=1 // pred_check_branch
      %656 = sbr.rel (0) target = $region57
    $region56: #{actor_forward.1} parent=1 // pred_region
      %657 = dma.done [#allocation4], 16
    $region57: #{actor_forward.1} parent=1 // pred_fallthru
      _
    // Predicated region
    $region58: #{actor_forward.1} parent=1 // pred_check
      _
    $region59: #{actor_forward.1} parent=1 // pred_check_branch
      %659 = sbr.rel (0) target = $region61
    $region60: #{actor_forward.1} parent=1 // pred_region
      %660 = dma.done [#allocation9], 16
    $region61: #{actor_forward.1} parent=1 // pred_fallthru
      _
    %661 = vsyncpa [#allocation3], 1
    %662 = vsyncpa [#allocation6], 1
    %663 = vsyncpa [#allocation4], 1
    %664 = vsyncpa [#allocation9], 1

</llo_original>
